<compile_context>
chip_gen: v5e
topology: v5e:2x2
jax: 0.10.0
libtpu: 0.0.40
codegen_flags: <defaults>
</compile_context>

<pallas_src>
import functools
import math

import jax
import jax.numpy as jnp
from jax import lax
from jax.experimental import pallas as pl
from jax.experimental.pallas import tpu as pltpu

_COMPILER_PARAMS = pltpu.CompilerParams(
    dimension_semantics=("arbitrary",),
    vmem_limit_bytes=32 * 1024 * 1024,
)


# --------------------------------------------------------------------------
# Fused GCN kernel:  out = act( D^-1/2 (A + missing self loops) D^-1/2 X W + b )
# optionally also emits the TopKPooling score tanh(out . p / ||p||) for the next pool.
# --------------------------------------------------------------------------
def _gcn_fused_kernel(*refs, apply_relu, with_score, fill):
    if with_score:
        a_ref, x_ref, w_ref, b_ref, p_ref, o_ref, s_ref = refs
    else:
        a_ref, x_ref, w_ref, b_ref, o_ref = refs

    n = a_ref.shape[0]
    f_in, f_out = w_ref.shape

    # ---- gcn_norm (improved=True) fused in-kernel -------------------------------
    a = a_ref[...]
    rows = lax.broadcasted_iota(jnp.int32, (n, n), 0)
    cols = lax.broadcasted_iota(jnp.int32, (n, n), 1)
    eye = rows == cols
    a = jnp.where(jnp.logical_and(eye, a == 0.0), fill, a)   # add missing self loops
    deg = jnp.sum(a, axis=1, keepdims=True)                  # (N, 1), f32
    dinv = jnp.where(deg > 0.0, lax.rsqrt(deg), 0.0)         # D^-1/2 (EUP rsqrt)

    # ---- projection + aggregation on the MXU (bf16 operands, f32 accumulation) --
    # Scale the skinny (N, F) operands instead of the (N, N) adjacency, and order the
    # matmuls so the N^2-sized dot runs over the narrower feature width.
    a_bf = a.astype(jnp.bfloat16)
    w_bf = w_ref[...].astype(jnp.bfloat16)
    x = x_ref[...]
    if f_out <= f_in:
        y = jnp.dot(x.astype(jnp.bfloat16), w_bf, preferred_element_type=jnp.float32)
        y = y * dinv
        out = jnp.dot(a_bf, y.astype(jnp.bfloat16), preferred_element_type=jnp.float32)
        out = out * dinv
    else:
        y = (x * dinv).astype(jnp.bfloat16)
        z = jnp.dot(a_bf, y, preferred_element_type=jnp.float32) * dinv
        out = jnp.dot(z.astype(jnp.bfloat16), w_bf, preferred_element_type=jnp.float32)
    out = out + b_ref[...]
    if apply_relu:
        out = jnp.maximum(out, 0.0)
    o_ref[...] = out

    if with_score:
        # TopKPooling score on this layer's output. p arrives pre-scaled by 1/||p||,
        # so this is just a VPU multiply + lane reduce + EUP tanh (no MXU, no divide).
        s = jnp.sum(out * p_ref[...], axis=-1, keepdims=True)
        s_ref[...] = jnp.tanh(s)


def gcn_conv(a, x, w, b, p=None, *, relu):
    """Fused (gcn_norm + GCNConv [+ TopKPooling score]) in a single Pallas kernel."""
    n, f_in = x.shape
    f_out = w.shape[1]
    with_score = p is not None
    kernel = functools.partial(_gcn_fused_kernel, apply_relu=relu,
                               with_score=with_score, fill=2.0)  # improved=True -> fill 2
    in_specs = [
        pl.BlockSpec((n, n), lambda i: (0, 0)),
        pl.BlockSpec((n, f_in), lambda i: (0, 0)),
        pl.BlockSpec((f_in, f_out), lambda i: (0, 0)),
        pl.BlockSpec((1, f_out), lambda i: (0, 0)),
    ]
    args = [a.astype(jnp.float32), x.astype(jnp.float32), w.astype(jnp.float32),
            b.reshape(1, f_out).astype(jnp.float32)]
    if with_score:
        # 1/||p|| precomputed once per forward (same no-epsilon semantics as PyG).
        p_scaled = (p / jnp.sqrt(jnp.sum(p * p))).reshape(1, f_out).astype(jnp.float32)
        in_specs.append(pl.BlockSpec((1, f_out), lambda i: (0, 0)))
        args.append(p_scaled)
        out_shape = (jax.ShapeDtypeStruct((n, f_out), jnp.float32),
                     jax.ShapeDtypeStruct((n, 1), jnp.float32))
        out_specs = (pl.BlockSpec((n, f_out), lambda i: (0, 0)),
                     pl.BlockSpec((n, 1), lambda i: (0, 0)))
    else:
        out_shape = jax.ShapeDtypeStruct((n, f_out), jnp.float32)
        out_specs = pl.BlockSpec((n, f_out), lambda i: (0, 0))

    result = pl.pallas_call(
        kernel, grid=(1,), in_specs=in_specs, out_specs=out_specs,
        out_shape=out_shape, compiler_params=_COMPILER_PARAMS)(*args)
    if with_score:
        out, score = result
        return out, score[:, 0]
    return result


# --------------------------------------------------------------------------
# Fused augment_adj: (A + I) @ (A + I) with the diagonal dropped -- ONE pallas_call.
# --------------------------------------------------------------------------
def _augment_adj_kernel(a_ref, o_ref):
    n = a_ref.shape[0]
    rows = lax.broadcasted_iota(jnp.int32, (n, n), 0)
    cols = lax.broadcasted_iota(jnp.int32, (n, n), 1)
    eye = rows == cols
    a1 = a_ref[...] + jnp.where(eye, 1.0, 0.0)                       # add_self_loops (w=1)
    a1_bf = a1.astype(jnp.bfloat16)
    a2 = jnp.dot(a1_bf, a1_bf, preferred_element_type=jnp.float32)   # A @ A on the MXU
    o_ref[...] = jnp.where(eye, 0.0, a2)                             # remove_self_loops


def augment_adj_dense(a):
    n = a.shape[0]
    return pl.pallas_call(
        _augment_adj_kernel, grid=(1,),
        in_specs=[pl.BlockSpec((n, n), lambda i: (0, 0))],
        out_specs=pl.BlockSpec((n, n), lambda i: (0, 0)),
        out_shape=jax.ShapeDtypeStruct((n, n), jnp.float32),
        compiler_params=_COMPILER_PARAMS,
    )(a.astype(jnp.float32))


# --------------------------------------------------------------------------
# TopKPooling select / gate / filter_adj (dynamic-shape glue stays in JAX)
# --------------------------------------------------------------------------
def topk_pool_dense(x, a, batch, score, ratio):
    n = x.shape[0]
    k = int(math.ceil(ratio * n))
    vals, perm = jax.lax.top_k(score, k)   # NOTE: tie-break order may differ from PyG topk
    x_new = x[perm] * vals[:, None]        # gate with tanh score
    a_new = a[perm][:, perm]               # filter_adj
    batch_new = batch[perm]
    return x_new, a_new, batch_new, perm


# --------------------------------------------------------------------------
# GraphUNet forward (sum_res=True, act=relu), dense adjacency
# --------------------------------------------------------------------------
def graph_unet_forward(params, x, a, batch, depth, ratio):
    # down conv 0; the score for pool level 1 is fused into the same kernel
    x, score = gcn_conv(a, x, params["down_w"][0], params["down_b"][0],
                        p=params["pool_w"][0], relu=True)

    xs, adjs, perms = [x], [a], []
    for i in range(1, depth + 1):
        a = augment_adj_dense(a)
        x, a, batch, perm = topk_pool_dense(x, a, batch, score, ratio)
        if i < depth:
            x, score = gcn_conv(a, x, params["down_w"][i], params["down_b"][i],
                                p=params["pool_w"][i], relu=True)
            xs.append(x)
            adjs.append(a)
        else:
            x = gcn_conv(a, x, params["down_w"][i], params["down_b"][i], relu=True)
        perms.append(perm)

    # bottleneck latents (this is what the repo's modified GraphUNet returns)
    latent_x, latent_adj, latent_batch = x, a, batch
    # TODO(synk): latent_edge is returned as a dense weighted adjacency; converting to a
    # sparse (2, E) edge_index needs data-dependent shapes (jnp.nonzero) and is left out.

    for i in range(depth):
        j = depth - 1 - i
        res, a_lvl, perm = xs[j], adjs[j], perms[j]
        up = jnp.zeros_like(res).at[perm].set(x)
        x = res + up                                  # sum_res=True
        x = gcn_conv(a_lvl, x, params["up_w"][i], params["up_b"][i],
                     relu=(i < depth - 1))
    return x, latent_x, latent_adj, latent_batch


# --------------------------------------------------------------------------
# Net: remove_self_loops -> add_self_loops -> GraphUNet
# --------------------------------------------------------------------------
def net_forward(params, x, edge_index, batch, depth, ratio):
    n = x.shape[0]
    a = jnp.zeros((n, n), dtype=jnp.float32)
    a = a.at[edge_index[1], edge_index[0]].set(1.0)  # A[t, s] = 1 for edge s -> t
    a = a * (1.0 - jnp.eye(n, dtype=jnp.float32))    # remove_self_loops
    a = a + jnp.eye(n, dtype=jnp.float32)            # add_self_loops (weight 1)
    return graph_unet_forward(params, x, a, batch, depth, ratio)


# --------------------------------------------------------------------------
# Deterministic parameter init (shapes follow GraphUNet(in, hidden, in, depth))
# --------------------------------------------------------------------------
def glorot(key, shape):
    fan_in, fan_out = shape
    lim = math.sqrt(6.0 / (fan_in + fan_out))
    return jax.random.uniform(key, shape, jnp.float32, -lim, lim)


def init_params(key, input_size, hidden, depth):
    keys = jax.random.split(key, 3 * (depth + 1) + depth)
    it = iter(keys)
    down_w = [glorot(next(it), (input_size, hidden))]
    down_b = [jnp.zeros((hidden,), jnp.float32)]
    for _ in range(depth):
        down_w.append(glorot(next(it), (hidden, hidden)))
        down_b.append(jnp.zeros((hidden,), jnp.float32))
    pool_w = [glorot(next(it), (hidden, 1))[:, 0] for _ in range(depth)]
    up_w, up_b = [], []
    for i in range(depth):
        out_c = hidden if i < depth - 1 else input_size
        up_w.append(glorot(next(it), (hidden, out_c)))
        up_b.append(jnp.zeros((out_c,), jnp.float32))
    return {"down_w": down_w, "down_b": down_b, "pool_w": pool_w,
            "up_w": up_w, "up_b": up_b}


# --------------------------------------------------------------------------
if __name__ == "__main__":
    INPUT_SIZE = 16    # node feature dim (in_channels == out_channels of GraphUNet)
    HIDDEN = 32        # `shapes` (hidden_channels)
    DEPTH = 2
    RATE = 0.5
    N = 12             # nodes (single graph -> batch all zeros)

    key = jax.random.PRNGKey(0)
    kx, kp = jax.random.split(key)

    x = jax.random.normal(kx, (N, INPUT_SIZE), jnp.float32)
    # symmetric ring graph
    src = jnp.arange(N, dtype=jnp.int32)
    dst = (src + 1) % N
    edge_index = jnp.concatenate(
        [jnp.stack([src, dst], axis=0), jnp.stack([dst, src], axis=0)], axis=1)
    batch = jnp.zeros((N,), jnp.int32)

    params = init_params(jax.random.PRNGKey(42), INPUT_SIZE, HIDDEN, DEPTH)

    d, latent_x, latent_edge, out_batch = net_forward(
        params, x, edge_index, batch, DEPTH, RATE)

    jax.block_until_ready((d, latent_x, latent_edge, out_batch))
    assert d.shape == (N, INPUT_SIZE)
    n_bottleneck = math.ceil(RATE * math.ceil(RATE * N))
    assert latent_x.shape == (n_bottleneck, HIDDEN)
    assert latent_edge.shape == (n_bottleneck, n_bottleneck)
    assert out_batch.shape == (n_bottleneck,)
    assert bool(jnp.all(jnp.isfinite(d)))
    print("KERNEL_OK")
</pallas_src>

<mosaic_0001>
module attributes {stable_mosaic.version = 11 : i64} {
  func.func @_gcn_fused_kernel(%arg0: i32, %arg1: memref<12x12xf32, #tpu.memory_space<vmem>>, %arg2: memref<12x16xf32, #tpu.memory_space<vmem>>, %arg3: memref<16x32xf32, #tpu.memory_space<vmem>>, %arg4: memref<1x32xf32, #tpu.memory_space<vmem>>, %arg5: memref<1x32xf32, #tpu.memory_space<vmem>>, %arg6: memref<12x32xf32, #tpu.memory_space<vmem>>, %arg7: memref<12x1xf32, #tpu.memory_space<vmem>>) attributes {dimension_semantics = [#tpu.dimension_semantics<arbitrary>], iteration_bounds = array<i64: 1>, scalar_prefetch = 0 : i64, scratch_operands = 0 : i64, tpu.core_type = #tpu.core_type<tc>, window_params = [{pipeline_mode = #tpu.pipeline_mode<synchronous>, transform_indices = @transform_0, window_bounds = array<i64: 12, 12>}, {pipeline_mode = #tpu.pipeline_mode<synchronous>, transform_indices = @transform_1, window_bounds = array<i64: 12, 16>}, {pipeline_mode = #tpu.pipeline_mode<synchronous>, transform_indices = @transform_2, window_bounds = array<i64: 16, 32>}, {pipeline_mode = #tpu.pipeline_mode<synchronous>, transform_indices = @transform_3, window_bounds = array<i64: 1, 32>}, {pipeline_mode = #tpu.pipeline_mode<synchronous>, transform_indices = @transform_4, window_bounds = array<i64: 1, 32>}, {pipeline_mode = #tpu.pipeline_mode<synchronous>, transform_indices = @transform_5, window_bounds = array<i64: 12, 32>}, {pipeline_mode = #tpu.pipeline_mode<synchronous>, transform_indices = @transform_6, window_bounds = array<i64: 12, 1>}]} {
    %c0 = arith.constant 0 : index
    %c0_0 = arith.constant 0 : index
    %0 = vector.load %arg1[%c0, %c0_0] : memref<12x12xf32, #tpu.memory_space<vmem>>, vector<12x12xf32>
    %1 = tpu.iota {dimensions = array<i32: 0>} : vector<12x12xi32>
    %2 = tpu.iota {dimensions = array<i32: 1>} : vector<12x12xi32>
    %3 = arith.cmpi eq, %1, %2 : vector<12x12xi32>
    %cst = arith.constant 0.000000e+00 : f32
    %4 = vector.broadcast %cst : f32 to vector<12x12xf32>
    %5 = arith.cmpf oeq, %0, %4 : vector<12x12xf32>
    %6 = arith.andi %3, %5 : vector<12x12xi1>
    %cst_1 = arith.constant 2.000000e+00 : f32
    %7 = vector.broadcast %cst_1 : f32 to vector<12x12xf32>
    %8 = arith.select %6, %7, %0 : vector<12x12xi1>, vector<12x12xf32>
    %cst_2 = arith.constant dense<0.000000e+00> : vector<12xf32>
    %9 = vector.multi_reduction <add>, %8, %cst_2 [1] : vector<12x12xf32> to vector<12xf32>
    %10 = vector.shape_cast %9 : vector<12xf32> to vector<12x1xf32>
    %cst_3 = arith.constant 0.000000e+00 : f32
    %11 = vector.broadcast %cst_3 : f32 to vector<12x1xf32>
    %12 = arith.cmpf ogt, %10, %11 : vector<12x1xf32>
    %13 = math.rsqrt %10 : vector<12x1xf32>
    %cst_4 = arith.constant 0.000000e+00 : f32
    %14 = vector.broadcast %cst_4 : f32 to vector<12x1xf32>
    %15 = arith.select %12, %13, %14 : vector<12x1xi1>, vector<12x1xf32>
    %16 = arith.truncf %8 : vector<12x12xf32> to vector<12x12xbf16>
    %c0_5 = arith.constant 0 : index
    %c0_6 = arith.constant 0 : index
    %17 = vector.load %arg3[%c0_5, %c0_6] : memref<16x32xf32, #tpu.memory_space<vmem>>, vector<16x32xf32>
    %18 = arith.truncf %17 : vector<16x32xf32> to vector<16x32xbf16>
    %c0_7 = arith.constant 0 : index
    %c0_8 = arith.constant 0 : index
    %19 = vector.load %arg2[%c0_7, %c0_8] : memref<12x16xf32, #tpu.memory_space<vmem>>, vector<12x16xf32>
    %20 = vector.broadcast %15 : vector<12x1xf32> to vector<12x16xf32>
    %21 = arith.mulf %19, %20 : vector<12x16xf32>
    %22 = arith.truncf %21 : vector<12x16xf32> to vector<12x16xbf16>
    %cst_9 = arith.constant dense<0.000000e+00> : vector<12x16xf32>
    %23 = tpu.matmul %16, %22, %cst_9 {dimension_numbers = #tpu.dot_dimension_numbers<[1], [0], [0], [1], [0, 0, 1, 1], [], []>} : vector<12x12xbf16>, vector<12x16xbf16>, vector<12x16xf32> -> vector<12x16xf32>
    %24 = vector.broadcast %15 : vector<12x1xf32> to vector<12x16xf32>
    %25 = arith.mulf %23, %24 : vector<12x16xf32>
    %26 = arith.truncf %25 : vector<12x16xf32> to vector<12x16xbf16>
    %cst_10 = arith.constant dense<0.000000e+00> : vector<12x32xf32>
    %27 = tpu.matmul %26, %18, %cst_10 {dimension_numbers = #tpu.dot_dimension_numbers<[1], [0], [0], [1], [0, 0, 1, 1], [], []>} : vector<12x16xbf16>, vector<16x32xbf16>, vector<12x32xf32> -> vector<12x32xf32>
    %c0_11 = arith.constant 0 : index
    %c0_12 = arith.constant 0 : index
    %28 = vector.load %arg4[%c0_11, %c0_12] : memref<1x32xf32, #tpu.memory_space<vmem>>, vector<1x32xf32>
    %29 = vector.broadcast %28 : vector<1x32xf32> to vector<12x32xf32>
    %30 = arith.addf %27, %29 : vector<12x32xf32>
    %cst_13 = arith.constant 0.000000e+00 : f32
    %31 = vector.broadcast %cst_13 : f32 to vector<12x32xf32>
    %32 = arith.maximumf %30, %31 : vector<12x32xf32>
    %c0_14 = arith.constant 0 : index
    %c0_15 = arith.constant 0 : index
    %33 = vector.load %arg6[%c0_14, %c0_15] : memref<12x32xf32, #tpu.memory_space<vmem>>, vector<12x32xf32>
    tpu.vector_store %arg6[%c0_14, %c0_15], %32 {strides = array<i32>} : memref<12x32xf32, #tpu.memory_space<vmem>>, vector<12x32xf32>,
    %c0_16 = arith.constant 0 : index
    %c0_17 = arith.constant 0 : index
    %34 = vector.load %arg5[%c0_16, %c0_17] : memref<1x32xf32, #tpu.memory_space<vmem>>, vector<1x32xf32>
    %35 = vector.broadcast %34 : vector<1x32xf32> to vector<12x32xf32>
    %36 = arith.mulf %32, %35 : vector<12x32xf32>
    %cst_18 = arith.constant dense<0.000000e+00> : vector<12xf32>
    %37 = vector.multi_reduction <add>, %36, %cst_18 [1] : vector<12x32xf32> to vector<12xf32>
    %38 = vector.shape_cast %37 : vector<12xf32> to vector<12x1xf32>
    %39 = math.tanh %38 : vector<12x1xf32>
    %c0_19 = arith.constant 0 : index
    %c0_20 = arith.constant 0 : index
    %40 = vector.load %arg7[%c0_19, %c0_20] : memref<12x1xf32, #tpu.memory_space<vmem>>, vector<12x1xf32>
    tpu.vector_store %arg7[%c0_19, %c0_20], %39 {strides = array<i32>} : memref<12x1xf32, #tpu.memory_space<vmem>>, vector<12x1xf32>,
    return
  }
  func.func @transform_0(%arg0: i32) -> (i32, i32) {
    %c0_i32 = arith.constant 0 : i32
    %c0_i32_0 = arith.constant 0 : i32
    %c0_i32_1 = arith.constant 0 : i32
    return %c0_i32, %c0_i32_0 : i32, i32
  }
  func.func @transform_1(%arg0: i32) -> (i32, i32) {
    %c0_i32 = arith.constant 0 : i32
    %c0_i32_0 = arith.constant 0 : i32
    %c0_i32_1 = arith.constant 0 : i32
    return %c0_i32, %c0_i32_0 : i32, i32
  }
  func.func @transform_2(%arg0: i32) -> (i32, i32) {
    %c0_i32 = arith.constant 0 : i32
    %c0_i32_0 = arith.constant 0 : i32
    %c0_i32_1 = arith.constant 0 : i32
    return %c0_i32, %c0_i32_0 : i32, i32
  }
  func.func @transform_3(%arg0: i32) -> (i32, i32) {
    %c0_i32 = arith.constant 0 : i32
    %c0_i32_0 = arith.constant 0 : i32
    %c0_i32_1 = arith.constant 0 : i32
    return %c0_i32, %c0_i32_0 : i32, i32
  }
  func.func @transform_4(%arg0: i32) -> (i32, i32) {
    %c0_i32 = arith.constant 0 : i32
    %c0_i32_0 = arith.constant 0 : i32
    %c0_i32_1 = arith.constant 0 : i32
    return %c0_i32, %c0_i32_0 : i32, i32
  }
  func.func @transform_5(%arg0: i32) -> (i32, i32) {
    %c0_i32 = arith.constant 0 : i32
    %c0_i32_0 = arith.constant 0 : i32
    %c0_i32_1 = arith.constant 0 : i32
    return %c0_i32, %c0_i32_0 : i32, i32
  }
  func.func @transform_6(%arg0: i32) -> (i32, i32) {
    %c0_i32 = arith.constant 0 : i32
    %c0_i32_0 = arith.constant 0 : i32
    %c0_i32_1 = arith.constant 0 : i32
    return %c0_i32, %c0_i32_0 : i32, i32
  }
}

</mosaic_0001>

<llo_original>
// kernel: tpu_custom_call.1
$region0: #{tpu_custom_call.1}
  #allocation0 [shape = 'u32[]', space=smem, size = 0x4, offset = 0x4, fixed_abs, tag = 'smem constant byte address 0x4 - core index']
  #allocation1 [shape = 'u32[72,128]{1,0:T(1,128)}', space=vmem, size = 0x9000, scoped, tag = 'internal scratch']
  %s0 = inlined_call_operand.hbm [shape: f32[12,12], index: 0, kind: input, shape index: {}]
  %s1 = inlined_call_operand.hbm [shape: f32[12,16], index: 1, kind: input, shape index: {}]
  %s2 = inlined_call_operand.hbm [shape: f32[16,32], index: 2, kind: input, shape index: {}]
  %s3 = inlined_call_operand.vmem [shape: f32[1,32], index: 3, kind: input, shape index: {}]
  %s4 = inlined_call_operand.vmem [shape: f32[1,32], index: 4, kind: input, shape index: {}]
  %s5 = inlined_call_operand.hbm [shape: f32[12,32], index: 5, kind: output, shape index: {0}]
  %s6 = inlined_call_operand.vmem [shape: f32[12,1], index: 6, kind: output, shape index: {1}]
  %7 = xla_tuple %s5, %s6
  %s8 = sld [smem:[#allocation0]]
  $region50: #{tpu_custom_call.1} parent=0
    _
  %s10 = ssub.s32 1, %s8
  %s11 = scalar_select 0, %s10, %s8
  $region1: #{tpu_custom_call.1} parent=0
    #allocation2 [shape = 'u8[8192]{0}', space=vmem, size = 0x2000, scoped, tag = 'input window, operand 0, single buffered']
    #allocation3 [shape = 's32[1]{0}', space=sflag, size = 0x4, scoped, tag = 'scoped memory for tpu_custom_call.1']
    #allocation4 [shape = 's32[1]{0}', space=sflag, size = 0x4, scoped, tag = 'scoped memory for tpu_custom_call.1']
    #allocation5 [shape = 'u8[8192]{0}', space=vmem, size = 0x2000, scoped, tag = 'input window, operand 1, single buffered']
    #allocation6 [shape = 's32[1]{0}', space=sflag, size = 0x4, scoped, tag = 'scoped memory for tpu_custom_call.1']
    #allocation7 [shape = 'u8[8192]{0}', space=vmem, size = 0x2000, scoped, tag = 'input window, operand 2, single buffered']
    #allocation8 [shape = 'u8[8192]{0}', space=vmem, size = 0x2000, scoped, tag = 'output window, operand 0, single buffered']
    %12 = vsyncpa [#allocation3], 0
    %13 = vsyncpa [#allocation6], 0
    %14 = vsyncpa [#allocation4], 0
    // Predicated region
    $region2: #{tpu_custom_call.1} parent=1 // pred_check
      _
    $region3: #{tpu_custom_call.1} parent=1 // pred_check_branch
      %16 = sbr.rel (0) target = $region5
    $region4: #{tpu_custom_call.1} parent=1 // pred_region
      %18 = vsyncadd [#allocation3], 0
      %s19 = sshll.u32 %s0, 4
      %s20 = int_to_ptr.hbm [resolvable:$true] %s19
      %s21 = sshll.u32 [#allocation2], 4
      %s22 = int_to_ptr.vmem [resolvable:$true] %s21
      %27 = dma.hbm_to_vmem [thread:$0]  %s20, 256, %s22, [#allocation3], 128, 128, 8
    $region5: #{tpu_custom_call.1} parent=1 // pred_fallthru
      _
    // Predicated region
    $region6: #{tpu_custom_call.1} parent=1 // pred_check
      _
    $region7: #{tpu_custom_call.1} parent=1 // pred_check_branch
      %29 = sbr.rel (0) target = $region9
    $region8: #{tpu_custom_call.1} parent=1 // pred_region
      %31 = vsyncadd [#allocation6], 0
      %s32 = sshll.u32 %s1, 4
      %s33 = int_to_ptr.hbm [resolvable:$true] %s32
      %s34 = sshll.u32 [#allocation5], 4
      %s35 = int_to_ptr.vmem [resolvable:$true] %s34
      %40 = dma.hbm_to_vmem [thread:$0]  %s33, 256, %s35, [#allocation6], 128, 128, 8
    $region9: #{tpu_custom_call.1} parent=1 // pred_fallthru
      _
    // Predicated region
    $region10: #{tpu_custom_call.1} parent=1 // pred_check
      _
    $region11: #{tpu_custom_call.1} parent=1 // pred_check_branch
      %42 = sbr.rel (0) target = $region13
    $region12: #{tpu_custom_call.1} parent=1 // pred_region
      %44 = vsyncadd [#allocation6], 0
      %s45 = sshll.u32 %s2, 4
      %s46 = int_to_ptr.hbm [resolvable:$true] %s45
      %s47 = sshll.u32 [#allocation7], 4
      %s48 = int_to_ptr.vmem [resolvable:$true] %s47
      %53 = dma.hbm_to_vmem [thread:$0]  %s46, 256, %s48, [#allocation6], 128, 128, 8
    $region13: #{tpu_custom_call.1} parent=1 // pred_fallthru
      _
    // Predicated region
    $region14: #{tpu_custom_call.1} parent=1 // pred_check
      _
    $region15: #{tpu_custom_call.1} parent=1 // pred_check_branch
      %55 = sbr.rel (0) target = $region17
    $region16: #{tpu_custom_call.1} parent=1 // pred_region
      _
    $region17: #{tpu_custom_call.1} parent=1 // pred_fallthru
      _
    // Predicated region
    $region18: #{tpu_custom_call.1} parent=1 // pred_check
      _
    $region19: #{tpu_custom_call.1} parent=1 // pred_check_branch
      %57 = sbr.rel (0) target = $region21
    $region20: #{tpu_custom_call.1} parent=1 // pred_region
      _
    $region21: #{tpu_custom_call.1} parent=1 // pred_fallthru
      _
    // Predicated region
    $region22: #{tpu_custom_call.1} parent=1 // pred_check
      _
    $region23: #{tpu_custom_call.1} parent=1 // pred_check_branch
      %59 = sbr.rel (0) target = $region25
    $region24: #{tpu_custom_call.1} parent=1 // pred_region
      %61 = dma.done [#allocation3], 256
    $region25: #{tpu_custom_call.1} parent=1 // pred_fallthru
      _
    // Predicated region
    $region26: #{tpu_custom_call.1} parent=1 // pred_check
      _
    $region27: #{tpu_custom_call.1} parent=1 // pred_check_branch
      %63 = sbr.rel (0) target = $region29
    $region28: #{tpu_custom_call.1} parent=1 // pred_region
      %65 = dma.done [#allocation6], 256
    $region29: #{tpu_custom_call.1} parent=1 // pred_fallthru
      _
    // Predicated region
    $region30: #{tpu_custom_call.1} parent=1 // pred_check
      _
    $region31: #{tpu_custom_call.1} parent=1 // pred_check_branch
      %67 = sbr.rel (0) target = $region33
    $region32: #{tpu_custom_call.1} parent=1 // pred_region
      %69 = dma.done [#allocation6], 256
    $region33: #{tpu_custom_call.1} parent=1 // pred_fallthru
      _
    %v71 = vld [vmem:[#allocation2] sm:$0xff]
    %v72 = vld [vmem:[#allocation2 + $0x8] sm:$0xf]
    %v73 = vlaneseq
    %v74 = vshrl.u32 %v73, 7
    %v75 = vadd.s32 %v74, 8
    %v76 = vlaneseq
    %v77 = vand.u32 %v76, 127
    %vm78 = vcmp.eq.s32.totalorder %v74, %v77
    %vm79 = vcmp.eq.s32.totalorder %v75, %v77
    %vm80 = vcmp.eq.f32.partialorder %v71, 0.0
    %vm81 = vcmp.eq.f32.partialorder %v72, 0.0
    %vm82 = vmand %vm78, %vm80
    %vm83 = vmand %vm79, %vm81
    %v84 = vsel %vm82, 2.0, %v71
    %v85 = vsel %vm83, 2.0, %v72
    %vm86 = vcmask 97280
    %v87 = vsel %vm86, %v84, 0.0
    %88 = vadd.xlane.f32.xlu0 %v87
    %v89 = vpop.xlane.xlu0 %88
    %vm90 = vcmask 93184
    %v91 = vsel %vm90, %v85, 0.0
    %92 = vadd.xlane.f32.xlu0 %v91
    %v93 = vpop.xlane.xlu0 %92
    %vm94 = vcmp.gt.f32.partialorder %v89, 0.0
    %vm95 = vcmp.gt.f32.partialorder %v93, 0.0
    %v96 = vrsqrt.pop %v89
    %v97 = vmul.f32 %v96, %v89
    %v98 = vmul.f32 %v97, %v96
    %v99 = vmul.f32 0.5, %v98
    %v100 = vsub.f32 1.5, %v99
    %v101 = vmul.f32 %v96, %v100
    %vm102 = vweird.f32 %v89
    %vm103 = vweird.f32 %v96
    %vm104 = vmor %vm102, %vm103
    %v105 = vsel %vm104, %v96, %v101
    %v106 = vrsqrt.pop %v93
    %v107 = vmul.f32 %v106, %v93
    %v108 = vmul.f32 %v107, %v106
    %v109 = vmul.f32 0.5, %v108
    %v110 = vsub.f32 1.5, %v109
    %v111 = vmul.f32 %v106, %v110
    %vm112 = vweird.f32 %v93
    %vm113 = vweird.f32 %v106
    %vm114 = vmor %vm112, %vm113
    %v115 = vsel %vm114, %v106, %v111
    %v116 = vsel %vm94, %v105, 0.0
    %v117 = vsel %vm95, %v115, 0.0
    %v118 = vpack.c.bf16 %v85, %v84
    %v119 = vld [vmem:[#allocation7] sm:$0xff]
    %v120 = vld [vmem:[#allocation7 + $0x8] sm:$0xff]
    %v121 = vpack.c.bf16 %v120, %v119
    %v122 = vld [vmem:[#allocation5] sm:$0xff]
    %v123 = vld [vmem:[#allocation5 + $0x8] sm:$0xf]
    %v124 = vmul.f32 %v122, %v116
    %v125 = vmul.f32 %v123, %v117
    %v126 = vpack.c.bf16 %v125, %v124
    %v128 = vsel %vm86, %v118, 0
    %vm130 = vcmask 1045504
    %v132 = vsel %vm130, %v126, 0
    %134 = vmatpush.bf16.msra.mxu0 0
    %135 = vmatpush.bf16.msra.mxu0 0
    %136 = vmatpush.bf16.msra.mxu0 0
    %137 = vmatpush.bf16.msra.mxu0 0
    %138 = vmatpush.bf16.msra.mxu0 0
    %139 = vmatpush.bf16.msra.mxu0 0
    %140 = vmatpush.bf16.msra.mxu0 0
    %141 = vmatpush.bf16.msra.mxu0 %v132
    %142 = vmatmul.bf16.gmra.mxu0 %v128
    %v143 = vpop.f32.mrf.mxu0
    %v144 = vadd.f32 0.0, %v143
    %v145 = vpop.f32.mrf.mxu0
    %v146 = vadd.f32 0.0, %v145
    %147 = vdwg.mxu0
    %v148 = vmul.f32 %v144, %v116
    %v149 = vmul.f32 %v146, %v117
    %v150 = vpack.c.bf16 %v149, %v148
    %v151 = vld [vmem:[%s3] sm:$0x1]
    %v153 = vperm.slane %v151, 0
    %vm155 = vcmask 130048
    %v157 = vsel %vm155, %v150, 0
    %159 = vmatpush.bf16.msra.mxu0 0
    %160 = vmatpush.bf16.msra.mxu0 0
    %161 = vmatpush.bf16.msra.mxu0 0
    %162 = vmatpush.bf16.msra.mxu0 0
    %163 = vmatpush.bf16.msra.mxu0 0
    %164 = vmatpush.bf16.msra.mxu0 0
    %165 = vmatpush.bf16.msra.mxu0 0
    %166 = vmatpush.bf16.msra.mxu0 %v121
    %167 = vmatmul.bf16.gmra.mxu0 %v157
    %v168 = vpop.f32.mrf.mxu0
    %v169 = vadd.f32 %v153, %v168
    %v170 = vpop.f32.mrf.mxu0
    %v171 = vadd.f32 %v153, %v170
    %172 = vdwg.mxu0
    %v173 = vmax.f32 %v169, 0.0
    %v174 = vmax.f32 %v171, 0.0
    %vm175 = vcmask 261120
    %176 = vst.msk [vmem:[#allocation8] sm:$0xff] %vm175, %v173
    %vm177 = vcmask 257024
    %178 = vst.msk [vmem:[#allocation8 + $0x8] sm:$0xf] %vm177, %v174
    %v179 = vld [vmem:[%s4] sm:$0x1]
    %v181 = vperm.slane %v179, 0
    %v183 = vmul.f32 %v173, %v181
    %v184 = vmul.f32 %v174, %v181
    %v185 = vsel %vm175, %v183, 0.0
    %186 = vadd.xlane.f32.xlu0 %v185
    %v187 = vpop.xlane.xlu0 %186
    %v188 = vsel %vm177, %v184, 0.0
    %189 = vadd.xlane.f32.xlu0 %v188
    %v190 = vpop.xlane.xlu0 %189
    %v191 = vtanh.pop %v187
    %v192 = vtanh.pop %v190
    %vm193 = vcmask 7168
    %194 = vst.msk [vmem:[%s6] sm:$0xff] %vm193, %v191
    %vm195 = vcmask 3072
    %196 = vst.msk [vmem:[%s6 + $0x8] sm:$0xf] %vm195, %v192
    // Predicated region
    $region34: #{tpu_custom_call.1} parent=1 // pred_check
      _
    $region35: #{tpu_custom_call.1} parent=1 // pred_check_branch
      %198 = sbr.rel (0) target = $region37
    $region36: #{tpu_custom_call.1} parent=1 // pred_region
      %200 = vsyncadd [#allocation4], 0
      %s201 = sshll.u32 [#allocation8], 4
      %s202 = int_to_ptr.vmem [resolvable:$true] %s201
      %s203 = sshll.u32 %s5, 4
      %s204 = int_to_ptr.hbm [resolvable:$true] %s203
      %209 = dma.vmem_to_hbm [thread:$0]  %s202, 256, %s204, [#allocation4], 128, 128, 8
    $region37: #{tpu_custom_call.1} parent=1 // pred_fallthru
      _
    // Predicated region
    $region38: #{tpu_custom_call.1} parent=1 // pred_check
      _
    $region39: #{tpu_custom_call.1} parent=1 // pred_check_branch
      %211 = sbr.rel (0) target = $region41
    $region40: #{tpu_custom_call.1} parent=1 // pred_region
      _
    $region41: #{tpu_custom_call.1} parent=1 // pred_fallthru
      _
    // Predicated region
    $region42: #{tpu_custom_call.1} parent=1 // pred_check
      _
    $region43: #{tpu_custom_call.1} parent=1 // pred_check_branch
      %213 = sbr.rel (0) target = $region45
    $region44: #{tpu_custom_call.1} parent=1 // pred_region
      %215 = dma.done [#allocation4], 256
    $region45: #{tpu_custom_call.1} parent=1 // pred_fallthru
      _
    // Predicated region
    $region46: #{tpu_custom_call.1} parent=1 // pred_check
      _
    $region47: #{tpu_custom_call.1} parent=1 // pred_check_branch
      %217 = sbr.rel (0) target = $region49
    $region48: #{tpu_custom_call.1} parent=1 // pred_region
      _
    $region49: #{tpu_custom_call.1} parent=1 // pred_fallthru
      _
    %218 = vsyncpa [#allocation3], 1
    %219 = vsyncpa [#allocation6], 1
    %220 = vsyncpa [#allocation4], 1

</llo_original>
